<compile_context>
chip_gen: v7x
topology: tpu7x:2x2x1
jax: 0.10.0
libtpu: 0.0.40
codegen_flags: <defaults>
</compile_context>

<pallas_src>
import functools

import jax
import jax.numpy as jnp
from jax.experimental import pallas as pl
from jax.experimental.pallas import tpu as pltpu

COMMITMENT_COST = 0.25


def _rvq_kernel(x_ref, eaug_ref, etaug_ref, out_ref, loss_ref,
                *, n_valid, needs_mask):
    """One grid step: a tile of TN tokens against all C codebooks.

    x_ref    : (TN, D)      f32  -- natural-layout tile of flattened inputs
    eaug_ref : (C, K, D+1)  f32  -- [-2*E | ||E||^2]   (grid-invariant)
    etaug_ref: (C, D+1, K)  f32  -- [E^T ; 0-row]       (grid-invariant)
    out_ref  : (TN, D)      f32  -- sum of quantized vectors over codebooks
    loss_ref : (1, 1)       f32  -- per-tile partial sum of squared errors
    """
    C, K, _ = eaug_ref.shape
    TN, D = x_ref.shape

    # Lane-dense working layout: tokens on the 128-wide lane axis (XLU is idle).
    x_t = x_ref[...].astype(jnp.float32).T                          # (D, TN)
    ones_row = jnp.ones((1, TN), jnp.float32)
    res = jnp.concatenate([x_t, ones_row], axis=0)                  # (D+1, TN)
    res0 = res                                                      # kept live: out = res0 - res

    iota_k = jax.lax.broadcasted_iota(jnp.int32, (K, TN), 0)        # hoisted, shared
    sq_err = jnp.zeros((1, TN), jnp.float32)                        # per-token loss accum

    # C is a small static constant -> unrolled Python loop.
    for c in range(C):
        # d2 (up to the token-constant ||res||^2, irrelevant for argmin) comes
        # straight off the MXU: rows of eaug are [-2*E_k, ||E_k||^2] and the
        # last row of `res` is ones.
        d2 = jnp.dot(eaug_ref[c], res,
                     preferred_element_type=jnp.float32)            # (K, TN)

        # argmin over K (sublane axis), first index on ties (torch.argmin).
        min_val = jnp.min(d2, axis=0, keepdims=True)                # (1, TN)
        idx = jnp.min(jnp.where(d2 <= min_val, iota_k, K),
                      axis=0, keepdims=True)                        # (1, TN)
        onehot = (iota_k == idx).astype(jnp.float32)                # (K, TN)

        # Gather codebook columns via one-hot matmul (MXU-friendly gather).
        # The appended zero row keeps the ones row of `res` intact.
        quant = jnp.dot(etaug_ref[c], onehot,
                        preferred_element_type=jnp.float32)         # (D+1, TN)

        res = res - quant
        # (quant - res_old) == -(res_new)  =>  diff^2 == res_new^2.
        # Sublane-only reduction in the hot loop; one cross-lane reduce at end.
        r = res[:D, :]                                              # drop ones row
        sq_err = sq_err + jnp.sum(r * r, axis=0, keepdims=True)     # (1, TN)

    # out = sum_c quant_c == res0 - res_final  (ones rows cancel).
    out_t = res0[:D, :] - res[:D, :]                                # (D, TN)
    out_ref[...] = out_t.T.astype(out_ref.dtype)                    # (TN, D)

    if needs_mask:
        # Boundary tile: lanes >= n_valid hold undefined pad data; exclude
        # them from the loss with a select (NOT a multiply, so NaN pads can't
        # poison the sum).  Their output rows are dropped by Pallas on store.
        col = (jax.lax.broadcasted_iota(jnp.int32, (1, TN), 1)
               + pl.program_id(0) * TN)
        sq_err = jnp.where(col < n_valid, sq_err, 0.0)

    loss_ref[...] = jnp.sum(sq_err, keepdims=True)                  # (1, 1)


def rvq_forward(x, embeddings, commitment_cost=COMMITMENT_COST, tile_n=1024):
    """x: (B, S, D) f32; embeddings: (C, K, D) f32 -> (out (B,S,D), loss ())."""
    B, S, D = x.shape
    C, K, _ = embeddings.shape
    N = B * S

    # Natural flat layout; reshape only (no copies / transposes around kernel).
    x_flat = x.reshape(N, D)

    # Token tile: large enough to amortize per-grid-step overhead, second-last
    # block dim must be a multiple of 8 unless it spans the full axis.
    tn = min(tile_n, N)
    if tn < N:
        tn = max(8, (tn // 8) * 8)
    num_tiles = int(pl.cdiv(N, tn))
    needs_mask = (N % tn) != 0

    # Grid-invariant codebook side data, hoisted out of the hot loop and
    # augmented so the distance bias rides the MXU:
    #   E_aug   = [-2*E | ||E||^2]   (C, K, D+1)
    #   E_t_aug = [E^T ; 0-row]      (C, D+1, K)
    e32 = embeddings.astype(jnp.float32)
    e_sq = jnp.sum(e32 * e32, axis=-1, keepdims=True)                # (C, K, 1)
    e_aug = jnp.concatenate([-2.0 * e32, e_sq], axis=-1)             # (C, K, D+1)
    e_t_aug = jnp.concatenate(
        [jnp.transpose(e32, (0, 2, 1)), jnp.zeros((C, 1, K), jnp.float32)],
        axis=1)                                                      # (C, D+1, K)

    kernel = functools.partial(_rvq_kernel, n_valid=N, needs_mask=needs_mask)
    grid_invariant = lambda i: (0, 0, 0)

    out_flat, loss_parts = pl.pallas_call(
        kernel,
        out_shape=(
            jax.ShapeDtypeStruct((N, D), x.dtype),
            jax.ShapeDtypeStruct((num_tiles, 1, 1), jnp.float32),
        ),
        grid_spec=pltpu.PrefetchScalarGridSpec(
            num_scalar_prefetch=0,
            grid=(num_tiles,),
            in_specs=[
                pl.BlockSpec((tn, D), lambda i: (i, 0)),
                pl.BlockSpec((C, K, D + 1), grid_invariant),
                pl.BlockSpec((C, D + 1, K), grid_invariant),
            ],
            out_specs=[
                pl.BlockSpec((tn, D), lambda i: (i, 0)),
                # Per-tile partial loss (no resident accumulator, keeps the
                # grid axis truly parallel for v7x's two TensorCores).
                pl.BlockSpec((None, 1, 1), lambda i: (i, 0, 0)),
            ],
        ),
        compiler_params=pltpu.CompilerParams(
            # Every grid step writes disjoint output blocks -> shardable.
            dimension_semantics=("parallel",),
            # Actual footprint at tile_n=1024, D=32, K=64 is ~2 MiB.
            vmem_limit_bytes=32 * 1024 * 1024,
        ),
    )(x_flat, e_aug, e_t_aug)

    out = out_flat.reshape(B, S, D)
    # per-codebook loss = (1+cc) * mean over (B*S*D); summed over codebooks.
    total_loss = (1.0 + commitment_cost) * jnp.sum(loss_parts) / float(N * D)
    return out, total_loss


def rvq_reference(x, embeddings, commitment_cost=COMMITMENT_COST):
    """Pure-JAX reference mirroring the PyTorch forward values."""
    B, S, D = x.shape
    res = x
    out = jnp.zeros_like(x)
    loss = jnp.float32(0.0)
    for c in range(embeddings.shape[0]):
        E = embeddings[c]
        flat = res.reshape(-1, D)
        d2 = jnp.sum((flat[:, None, :] - E[None, :, :]) ** 2, axis=-1)
        idx = jnp.argmin(d2, axis=-1)
        quant = E[idx].reshape(B, S, D)
        loss = loss + (1.0 + commitment_cost) * jnp.mean((quant - res) ** 2)
        out = out + quant
        res = res - quant
    return out, loss


if __name__ == "__main__":
    # Module hyperparameters (small, consistent with the PyTorch module).
    num_codebooks = 2
    codebook_size = 64
    embedding_dim = 32
    batch, seq_len = 2, 8

    key = jax.random.PRNGKey(0)
    k_x, k_e = jax.random.split(key)

    # Deterministic parameter init: nn.init.uniform_(weight, -0.1, 0.1)
    embeddings = jax.random.uniform(
        k_e, (num_codebooks, codebook_size, embedding_dim),
        minval=-0.1, maxval=0.1, dtype=jnp.float32)

    x = jax.random.normal(k_x, (batch, seq_len, embedding_dim),
                          dtype=jnp.float32)

    out, loss = rvq_forward(x, embeddings)
    out = jax.block_until_ready(out)
    loss = jax.block_until_ready(loss)

    out_ref, loss_ref = rvq_reference(x, embeddings)
    assert out.shape == (batch, seq_len, embedding_dim)
    assert jnp.allclose(out, out_ref, atol=1e-5, rtol=1e-5), "output mismatch"
    assert jnp.allclose(loss, loss_ref, atol=1e-5, rtol=1e-5), "loss mismatch"

    print("KERNEL_OK")
</pallas_src>

<mosaic_0001>
module attributes {stable_mosaic.version = 11 : i64} {
  func.func @_rvq_kernel(%arg0: i32, %arg1: memref<16x32xf32, #tpu.memory_space<vmem>>, %arg2: memref<2x64x33xf32, #tpu.memory_space<vmem>>, %arg3: memref<2x33x64xf32, #tpu.memory_space<vmem>>, %arg4: memref<16x32xf32, #tpu.memory_space<vmem>>, %arg5: memref<1x1x1xf32, #tpu.memory_space<vmem>>) attributes {dimension_semantics = [#tpu.dimension_semantics<parallel>], iteration_bounds = array<i64: 1>, scalar_prefetch = 0 : i64, scratch_operands = 0 : i64, tpu.core_type = #tpu.core_type<tc>, window_params = [{transform_indices = @transform_0, window_bounds = array<i64: 16, 32>}, {pipeline_mode = #tpu.pipeline_mode<synchronous>, transform_indices = @transform_1, window_bounds = array<i64: 2, 64, 33>}, {pipeline_mode = #tpu.pipeline_mode<synchronous>, transform_indices = @transform_2, window_bounds = array<i64: 2, 33, 64>}, {transform_indices = @transform_3, window_bounds = array<i64: 16, 32>}, {transform_indices = @transform_4, window_bounds = array<i64: 1, 1, 1>}]} {
    %c0 = arith.constant 0 : index
    %c0_0 = arith.constant 0 : index
    %0 = vector.load %arg1[%c0, %c0_0] : memref<16x32xf32, #tpu.memory_space<vmem>>, vector<16x32xf32>
    %1 = tpu.transpose %0, [1, 0] : vector<16x32xf32> -> vector<32x16xf32>
    %cst = arith.constant 1.000000e+00 : f32
    %2 = vector.broadcast %cst : f32 to vector<1x16xf32>
    %3 = tpu.concatenate %1, %2 in 0 : vector<32x16xf32>, vector<1x16xf32> -> vector<33x16xf32>
    %4 = tpu.iota {dimensions = array<i32: 0>} : vector<64x16xi32>
    %cst_1 = arith.constant 0.000000e+00 : f32
    %5 = vector.broadcast %cst_1 : f32 to vector<1x16xf32>
    %c0_2 = arith.constant 0 : index
    %c0_3 = arith.constant 0 : index
    %c0_4 = arith.constant 0 : index
    %6 = vector.load %arg2[%c0_2, %c0_3, %c0_4] : memref<2x64x33xf32, #tpu.memory_space<vmem>>, vector<1x64x33xf32>
    %7 = vector.shape_cast %6 : vector<1x64x33xf32> to vector<64x33xf32>
    %cst_5 = arith.constant dense<0.000000e+00> : vector<64x16xf32>
    %8 = tpu.matmul %7, %3, %cst_5 {dimension_numbers = #tpu.dot_dimension_numbers<[1], [0], [0], [1], [0, 0, 1, 1], [], []>} : vector<64x33xf32>, vector<33x16xf32>, vector<64x16xf32> -> vector<64x16xf32>
    %cst_6 = arith.constant dense<0x7F800000> : vector<16xf32>
    %9 = vector.multi_reduction <minimumf>, %8, %cst_6 [0] : vector<64x16xf32> to vector<16xf32>
    %10 = vector.shape_cast %9 : vector<16xf32> to vector<1x16xf32>
    %11 = vector.broadcast %10 : vector<1x16xf32> to vector<64x16xf32>
    %12 = arith.cmpf ole, %8, %11 : vector<64x16xf32>
    %c64_i32 = arith.constant 64 : i32
    %13 = vector.broadcast %c64_i32 : i32 to vector<64x16xi32>
    %14 = arith.select %12, %4, %13 : vector<64x16xi1>, vector<64x16xi32>
    %cst_7 = arith.constant dense<2147483647> : vector<16xi32>
    %15 = vector.multi_reduction <minsi>, %14, %cst_7 [0] : vector<64x16xi32> to vector<16xi32>
    %16 = vector.shape_cast %15 : vector<16xi32> to vector<1x16xi32>
    %17 = vector.broadcast %16 : vector<1x16xi32> to vector<64x16xi32>
    %18 = arith.cmpi eq, %4, %17 : vector<64x16xi32>
    %19 = arith.extui %18 : vector<64x16xi1> to vector<64x16xi32>
    %20 = arith.sitofp %19 : vector<64x16xi32> to vector<64x16xf32>
    %c0_8 = arith.constant 0 : index
    %c0_9 = arith.constant 0 : index
    %c0_10 = arith.constant 0 : index
    %21 = vector.load %arg3[%c0_8, %c0_9, %c0_10] : memref<2x33x64xf32, #tpu.memory_space<vmem>>, vector<1x33x64xf32>
    %22 = vector.shape_cast %21 : vector<1x33x64xf32> to vector<33x64xf32>
    %cst_11 = arith.constant dense<0.000000e+00> : vector<33x16xf32>
    %23 = tpu.matmul %22, %20, %cst_11 {dimension_numbers = #tpu.dot_dimension_numbers<[1], [0], [0], [1], [0, 0, 1, 1], [], []>} : vector<33x64xf32>, vector<64x16xf32>, vector<33x16xf32> -> vector<33x16xf32>
    %24 = arith.subf %3, %23 : vector<33x16xf32>
    %25 = vector.extract_strided_slice %24 {offsets = [0, 0], sizes = [32, 16], strides = [1, 1]} : vector<33x16xf32> to vector<32x16xf32>
    %26 = arith.mulf %25, %25 : vector<32x16xf32>
    %cst_12 = arith.constant dense<0.000000e+00> : vector<16xf32>
    %27 = vector.multi_reduction <add>, %26, %cst_12 [0] : vector<32x16xf32> to vector<16xf32>
    %28 = vector.shape_cast %27 : vector<16xf32> to vector<1x16xf32>
    %29 = arith.addf %5, %28 : vector<1x16xf32>
    %c1 = arith.constant 1 : index
    %c0_13 = arith.constant 0 : index
    %c0_14 = arith.constant 0 : index
    %30 = vector.load %arg2[%c1, %c0_13, %c0_14] : memref<2x64x33xf32, #tpu.memory_space<vmem>>, vector<1x64x33xf32>
    %31 = vector.shape_cast %30 : vector<1x64x33xf32> to vector<64x33xf32>
    %cst_15 = arith.constant dense<0.000000e+00> : vector<64x16xf32>
    %32 = tpu.matmul %31, %24, %cst_15 {dimension_numbers = #tpu.dot_dimension_numbers<[1], [0], [0], [1], [0, 0, 1, 1], [], []>} : vector<64x33xf32>, vector<33x16xf32>, vector<64x16xf32> -> vector<64x16xf32>
    %cst_16 = arith.constant dense<0x7F800000> : vector<16xf32>
    %33 = vector.multi_reduction <minimumf>, %32, %cst_16 [0] : vector<64x16xf32> to vector<16xf32>
    %34 = vector.shape_cast %33 : vector<16xf32> to vector<1x16xf32>
    %35 = vector.broadcast %34 : vector<1x16xf32> to vector<64x16xf32>
    %36 = arith.cmpf ole, %32, %35 : vector<64x16xf32>
    %c64_i32_17 = arith.constant 64 : i32
    %37 = vector.broadcast %c64_i32_17 : i32 to vector<64x16xi32>
    %38 = arith.select %36, %4, %37 : vector<64x16xi1>, vector<64x16xi32>
    %cst_18 = arith.constant dense<2147483647> : vector<16xi32>
    %39 = vector.multi_reduction <minsi>, %38, %cst_18 [0] : vector<64x16xi32> to vector<16xi32>
    %40 = vector.shape_cast %39 : vector<16xi32> to vector<1x16xi32>
    %41 = vector.broadcast %40 : vector<1x16xi32> to vector<64x16xi32>
    %42 = arith.cmpi eq, %4, %41 : vector<64x16xi32>
    %43 = arith.extui %42 : vector<64x16xi1> to vector<64x16xi32>
    %44 = arith.sitofp %43 : vector<64x16xi32> to vector<64x16xf32>
    %c1_19 = arith.constant 1 : index
    %c0_20 = arith.constant 0 : index
    %c0_21 = arith.constant 0 : index
    %45 = vector.load %arg3[%c1_19, %c0_20, %c0_21] : memref<2x33x64xf32, #tpu.memory_space<vmem>>, vector<1x33x64xf32>
    %46 = vector.shape_cast %45 : vector<1x33x64xf32> to vector<33x64xf32>
    %cst_22 = arith.constant dense<0.000000e+00> : vector<33x16xf32>
    %47 = tpu.matmul %46, %44, %cst_22 {dimension_numbers = #tpu.dot_dimension_numbers<[1], [0], [0], [1], [0, 0, 1, 1], [], []>} : vector<33x64xf32>, vector<64x16xf32>, vector<33x16xf32> -> vector<33x16xf32>
    %48 = arith.subf %24, %47 : vector<33x16xf32>
    %49 = vector.extract_strided_slice %48 {offsets = [0, 0], sizes = [32, 16], strides = [1, 1]} : vector<33x16xf32> to vector<32x16xf32>
    %50 = arith.mulf %49, %49 : vector<32x16xf32>
    %cst_23 = arith.constant dense<0.000000e+00> : vector<16xf32>
    %51 = vector.multi_reduction <add>, %50, %cst_23 [0] : vector<32x16xf32> to vector<16xf32>
    %52 = vector.shape_cast %51 : vector<16xf32> to vector<1x16xf32>
    %53 = arith.addf %29, %52 : vector<1x16xf32>
    %54 = vector.extract_strided_slice %3 {offsets = [0, 0], sizes = [32, 16], strides = [1, 1]} : vector<33x16xf32> to vector<32x16xf32>
    %55 = vector.extract_strided_slice %48 {offsets = [0, 0], sizes = [32, 16], strides = [1, 1]} : vector<33x16xf32> to vector<32x16xf32>
    %56 = arith.subf %54, %55 : vector<32x16xf32>
    %57 = tpu.transpose %56, [1, 0] : vector<32x16xf32> -> vector<16x32xf32>
    %c0_24 = arith.constant 0 : index
    %c0_25 = arith.constant 0 : index
    %58 = vector.load %arg4[%c0_24, %c0_25] : memref<16x32xf32, #tpu.memory_space<vmem>>, vector<16x32xf32>
    tpu.vector_store %arg4[%c0_24, %c0_25], %57 {strides = array<i32>} : memref<16x32xf32, #tpu.memory_space<vmem>>, vector<16x32xf32>,
    %59 = vector.shape_cast %53 : vector<1x16xf32> to vector<1x1x16xf32>
    %cst_26 = arith.constant dense<0.000000e+00> : vector<1xf32>
    %60 = vector.multi_reduction <add>, %59, %cst_26 [1, 2] : vector<1x1x16xf32> to vector<1xf32>
    %61 = vector.shape_cast %60 : vector<1xf32> to vector<1x1x1xf32>
    %62 = vector.extract %61[0, 0, 0] : f32 from vector<1x1x1xf32>
    %63 = vector.broadcast %62 : f32 to vector<1x1xf32>
    %c0_27 = arith.constant 0 : index
    %c0_28 = arith.constant 0 : index
    %c0_29 = arith.constant 0 : index
    %64 = vector.load %arg5[%c0_27, %c0_28, %c0_29] : memref<1x1x1xf32, #tpu.memory_space<vmem>>, vector<1x1x1xf32>
    %65 = vector.shape_cast %64 : vector<1x1x1xf32> to vector<1x1xf32>
    %66 = vector.shape_cast %63 : vector<1x1xf32> to vector<1x1x1xf32>
    tpu.vector_store %arg5[%c0_27, %c0_28, %c0_29], %66 {strides = array<i32>} : memref<1x1x1xf32, #tpu.memory_space<vmem>>, vector<1x1x1xf32>,
    return
  }
  func.func @transform_0(%arg0: i32) -> (i32, i32) {
    %c0_i32 = arith.constant 0 : i32
    %c0_i32_0 = arith.constant 0 : i32
    return %arg0, %c0_i32 : i32, i32
  }
  func.func @transform_1(%arg0: i32) -> (i32, i32, i32) {
    %c0_i32 = arith.constant 0 : i32
    %c0_i32_0 = arith.constant 0 : i32
    %c0_i32_1 = arith.constant 0 : i32
    %c0_i32_2 = arith.constant 0 : i32
    return %c0_i32, %c0_i32_0, %c0_i32_1 : i32, i32, i32
  }
  func.func @transform_2(%arg0: i32) -> (i32, i32, i32) {
    %c0_i32 = arith.constant 0 : i32
    %c0_i32_0 = arith.constant 0 : i32
    %c0_i32_1 = arith.constant 0 : i32
    %c0_i32_2 = arith.constant 0 : i32
    return %c0_i32, %c0_i32_0, %c0_i32_1 : i32, i32, i32
  }
  func.func @transform_3(%arg0: i32) -> (i32, i32) {
    %c0_i32 = arith.constant 0 : i32
    %c0_i32_0 = arith.constant 0 : i32
    return %arg0, %c0_i32 : i32, i32
  }
  func.func @transform_4(%arg0: i32) -> (i32, i32, i32) {
    %c0_i32 = arith.constant 0 : i32
    %c0_i32_0 = arith.constant 0 : i32
    %c0_i32_1 = arith.constant 0 : i32
    return %arg0, %c0_i32, %c0_i32_0 : i32, i32, i32
  }
}

</mosaic_0001>

<llo_original>
// kernel: tpu_custom_call.1
$region0: #{tpu_custom_call.1}
  #allocation0 [shape = 'u32[]', space=smem, size = 0x4, offset = 0x4, fixed_abs, tag = 'smem constant byte address 0x4 - core index']
  #allocation1 [shape = 'u32[144,128]{1,0:T(1,128)}', space=vmem, size = 0x12000, scoped, tag = 'internal scratch']
  %s0 = inlined_call_operand.vmem [shape: f32[16,32], index: 0, kind: input, shape index: {}]
  %s1 = inlined_call_operand.vmem [shape: f32[2,64,33], index: 1, kind: input, shape index: {}]
  %s2 = inlined_call_operand.vmem [shape: f32[2,33,64], index: 2, kind: input, shape index: {}]
  %s3 = inlined_call_operand.hbm [shape: f32[16,32], index: 3, kind: output, shape index: {0}]
  %s4 = inlined_call_operand.hbm [shape: f32[1,1,1], index: 4, kind: output, shape index: {1}]
  %5 = xla_tuple %s3, %s4
  %s6 = sld [smem:[#allocation0]]
  $region30: #{tpu_custom_call.1} parent=0
    _
  %s8 = ssub.s32 1, %s6
  %s9 = scalar_select 0, %s8, %s6
  $region1: #{tpu_custom_call.1} parent=0
    #allocation2 [shape = 'u8[8192]{0}', space=vmem, size = 0x2000, scoped, tag = 'output window, operand 0, single buffered']
    #allocation3 [shape = 's32[1]{0}', space=sflag, size = 0x4, scoped, tag = 'scoped memory for tpu_custom_call.1']
    #allocation4 [shape = 'u8[512]{0}', space=vmem, size = 0x400, scoped, tag = 'output window, operand 1, single buffered']
    #allocation5 [shape = 's32[1]{0}', space=sflag, size = 0x4, scoped, tag = 'scoped memory for tpu_custom_call.1']
    %10 = vsyncpa [#allocation3], 0
    %11 = vsyncpa [#allocation5], 0
    // Predicated region
    $region2: #{tpu_custom_call.1} parent=1 // pred_check
      _
    $region3: #{tpu_custom_call.1} parent=1 // pred_check_branch
      %13 = sbr.rel (0) target = $region5
    $region4: #{tpu_custom_call.1} parent=1 // pred_region
      _
    $region5: #{tpu_custom_call.1} parent=1 // pred_fallthru
      _
    // Predicated region
    $region6: #{tpu_custom_call.1} parent=1 // pred_check
      _
    $region7: #{tpu_custom_call.1} parent=1 // pred_check_branch
      %15 = sbr.rel (0) target = $region9
    $region8: #{tpu_custom_call.1} parent=1 // pred_region
      _
    $region9: #{tpu_custom_call.1} parent=1 // pred_fallthru
      _
    // Predicated region
    $region10: #{tpu_custom_call.1} parent=1 // pred_check
      _
    $region11: #{tpu_custom_call.1} parent=1 // pred_check_branch
      %17 = sbr.rel (0) target = $region13
    $region12: #{tpu_custom_call.1} parent=1 // pred_region
      _
    $region13: #{tpu_custom_call.1} parent=1 // pred_fallthru
      _
    %v18 = vld [vmem:[%s0] sm:$0xff]
    %v19 = vld [vmem:[%s0 + $0x8] sm:$0xff]
    %20 = vxpose.xlu0.b32.start [1/16] %v18, 128
    %21 = vxpose.xlu0.b32.cont [2/16] %v19, 128
    %22 = vxpose.xlu0.b32.cont [3/16] 0.0, 128
    %23 = vxpose.xlu0.b32.cont [4/16] 0.0, 128
    %24 = vxpose.xlu0.b32.cont [5/16] 0.0, 128
    %25 = vxpose.xlu0.b32.cont [6/16] 0.0, 128
    %26 = vxpose.xlu0.b32.cont [7/16] 0.0, 128
    %27 = vxpose.xlu0.b32.cont [8/16] 0.0, 128
    %28 = vxpose.xlu0.b32.cont [9/16] 0.0, 128
    %29 = vxpose.xlu0.b32.cont [10/16] 0.0, 128
    %30 = vxpose.xlu0.b32.cont [11/16] 0.0, 128
    %31 = vxpose.xlu0.b32.cont [12/16] 0.0, 128
    %32 = vxpose.xlu0.b32.cont [13/16] 0.0, 128
    %33 = vxpose.xlu0.b32.cont [14/16] 0.0, 128
    %34 = vxpose.xlu0.b32.cont [15/16] 0.0, 128
    %35 = vxpose.xlu0.b32.end [16/16] 0.0, 128
    %v36 = vpop.trf.xlu0
    %v37 = vpop.trf.xlu0
    %v38 = vpop.trf.xlu0
    %v39 = vpop.trf.xlu0
    %v40 = vpop.trf.xlu0
    %v41 = vpop.trf.xlu0
    %v42 = vpop.trf.xlu0
    %v43 = vpop.trf.xlu0
    %v44 = vpop.trf.xlu0
    %v45 = vpop.trf.xlu0
    %v46 = vpop.trf.xlu0
    %v47 = vpop.trf.xlu0
    %v48 = vpop.trf.xlu0
    %v49 = vpop.trf.xlu0
    %v50 = vpop.trf.xlu0
    %v51 = vpop.trf.xlu0
    %v52 = vlaneseq
    %v53 = vshrl.u32 %v52, 7
    %v54 = vadd.s32 %v53, 8
    %v55 = vadd.s32 %v53, 16
    %v56 = vadd.s32 %v53, 24
    %v57 = vadd.s32 %v53, 32
    %v58 = vadd.s32 %v53, 40
    %v59 = vadd.s32 %v53, 48
    %v60 = vadd.s32 %v53, 56
    %v61 = vld [vmem:[%s1] sm:$0xff]
    %v62 = vld [vmem:[%s1 + $0x8] sm:$0xff]
    %v63 = vld [vmem:[%s1 + $0x10] sm:$0xff]
    %v64 = vld [vmem:[%s1 + $0x18] sm:$0xff]
    %v65 = vld [vmem:[%s1 + $0x20] sm:$0xff]
    %v66 = vld [vmem:[%s1 + $0x28] sm:$0xff]
    %v67 = vld [vmem:[%s1 + $0x30] sm:$0xff]
    %v68 = vld [vmem:[%s1 + $0x38] sm:$0xff]
    %vm69 = vcmask 269312
    %v71 = vsel %vm69, %v61, 0
    %v74 = vsel %vm69, %v62, 0
    %v77 = vsel %vm69, %v63, 0
    %v80 = vsel %vm69, %v64, 0
    %v83 = vsel %vm69, %v65, 0
    %v86 = vsel %vm69, %v66, 0
    %v89 = vsel %vm69, %v67, 0
    %v92 = vsel %vm69, %v68, 0
    %vm94 = vcmask 1040384
    %v96 = vsel %vm94, 1.0, 0
    %98 = vmatprep.subr.mxu0 0.0
    %99 = vmatpush1.msra.mxu0 %v36
    %100 = vmatprep.subr.mxu0 0.0
    %101 = vmatpush1.msra.mxu0 %v37
    %102 = vmatprep.subr.mxu0 0.0
    %103 = vmatpush1.msra.mxu0 %v38
    %104 = vmatprep.subr.mxu0 0.0
    %105 = vmatpush1.msra.mxu0 %v39
    %106 = vmatprep.subr.mxu0 0.0
    %107 = vmatpush1.msra.mxu0 %v96
    %108 = vmatprep.subr.mxu0 0.0
    %109 = vmatpush1.msra.mxu0 0.0
    %110 = vmatprep.subr.mxu0 0.0
    %111 = vmatpush1.msra.mxu0 0.0
    %112 = vmatprep.subr.mxu0 0.0
    %113 = vmatpush1.msra.mxu0 0.0
    %114 = vmatprep.subr.mxu0 0.0
    %115 = vmatpush1.msra.mxu0 0.0
    %116 = vmatprep.subr.mxu0 0.0
    %117 = vmatpush1.msra.mxu0 0.0
    %118 = vmatprep.subr.mxu0 0.0
    %119 = vmatpush1.msra.mxu0 0.0
    %120 = vmatprep.subr.mxu0 0.0
    %121 = vmatpush1.msra.mxu0 0.0
    %122 = vmatprep.subr.mxu0 0.0
    %123 = vmatpush1.msra.mxu0 0.0
    %124 = vmatprep.subr.mxu0 0.0
    %125 = vmatpush1.msra.mxu0 0.0
    %126 = vmatprep.subr.mxu0 0.0
    %127 = vmatpush1.msra.mxu0 0.0
    %128 = vmatprep.subr.mxu0 0.0
    %129 = vmatpush1.msra.mxu0 0.0
    %130 = vmatprep.subr.mxu0 0.0
    %131 = vmatpush1.msra.mxu0 0.0
    %132 = vmatprep.subr.mxu0 0.0
    %133 = vmatpush1.msra.mxu0 0.0
    %134 = vmatprep.subr.mxu0 0.0
    %135 = vmatpush1.msra.mxu0 0.0
    %136 = vmatprep.subr.mxu0 0.0
    %137 = vmatpush1.msra.mxu0 0.0
    %138 = vmatprep.subr.mxu0 0.0
    %139 = vmatpush1.msra.mxu0 0.0
    %140 = vmatprep.subr.mxu0 0.0
    %141 = vmatpush1.msra.mxu0 0.0
    %142 = vmatprep.subr.mxu0 0.0
    %143 = vmatpush1.msra.mxu0 0.0
    %144 = vmatprep.subr.mxu0 0.0
    %145 = vmatpush1.msra.mxu0 0.0
    %146 = vmatprep.subr.mxu0 0.0
    %147 = vmatpush1.msra.mxu0 0.0
    %148 = vmatprep.subr.mxu0 0.0
    %149 = vmatpush1.msra.mxu0 0.0
    %150 = vmatprep.subr.mxu0 0.0
    %151 = vmatpush1.msra.mxu0 0.0
    %152 = vmatprep.subr.mxu0 0.0
    %153 = vmatpush1.msra.mxu0 0.0
    %154 = vmatprep.subr.mxu0 0.0
    %155 = vmatpush1.msra.mxu0 0.0
    %156 = vmatprep.subr.mxu0 0.0
    %157 = vmatpush1.msra.mxu0 0.0
    %158 = vmatprep.subr.mxu0 0.0
    %159 = vmatpush1.msra.mxu0 0.0
    %160 = vmatprep.subr.mxu0 0.0
    %161 = vmatpush1.msra.mxu0 0.0
    %162 = vmatprep.mubr.f32.mxu0 0.0
    %163 = vmatmul.mubr.f32.gmra.mrb[0].mxu0 %v71
    %v164 = vpop.f32.mrb[0].mxu0
    %v165 = vadd.f32 0.0, %v164
    %v166 = vpop.f32.mrb[0].mxu0
    %167 = vmatprep.mubr.f32.mxu0 0.0
    %168 = vmatmul.mubr.f32.gmra.mrb[0].mxu0 %v74
    %v169 = vpop.f32.mrb[0].mxu0
    %v170 = vadd.f32 0.0, %v169
    %v171 = vpop.f32.mrb[0].mxu0
    %172 = vmatprep.mubr.f32.mxu0 0.0
    %173 = vmatmul.mubr.f32.gmra.mrb[0].mxu0 %v77
    %v174 = vpop.f32.mrb[0].mxu0
    %v175 = vadd.f32 0.0, %v174
    %v176 = vpop.f32.mrb[0].mxu0
    %177 = vmatprep.mubr.f32.mxu0 0.0
    %178 = vmatmul.mubr.f32.gmra.mrb[0].mxu0 %v80
    %v179 = vpop.f32.mrb[0].mxu0
    %v180 = vadd.f32 0.0, %v179
    %v181 = vpop.f32.mrb[0].mxu0
    %182 = vmatprep.mubr.f32.mxu0 0.0
    %183 = vmatmul.mubr.f32.gmra.mrb[0].mxu0 %v83
    %v184 = vpop.f32.mrb[0].mxu0
    %v185 = vadd.f32 0.0, %v184
    %v186 = vpop.f32.mrb[0].mxu0
    %187 = vmatprep.mubr.f32.mxu0 0.0
    %188 = vmatmul.mubr.f32.gmra.mrb[0].mxu0 %v86
    %v189 = vpop.f32.mrb[0].mxu0
    %v190 = vadd.f32 0.0, %v189
    %v191 = vpop.f32.mrb[0].mxu0
    %192 = vmatprep.mubr.f32.mxu0 0.0
    %193 = vmatmul.mubr.f32.gmra.mrb[0].mxu0 %v89
    %v194 = vpop.f32.mrb[0].mxu0
    %v195 = vadd.f32 0.0, %v194
    %v196 = vpop.f32.mrb[0].mxu0
    %197 = vmatprep.mubr.f32.mxu0 0.0
    %198 = vmatmul.mubr.f32.gmra.mrb[0].mxu0 %v92
    %v199 = vpop.f32.mrb[0].mxu0
    %v200 = vadd.f32 0.0, %v199
    %v201 = vpop.f32.mrb[0].mxu0
    %202 = vdwg.mxu0
    %vm203 = vcmask 130048
    %v204 = vsel %vm203, %v165, inf
    %v205 = vsel %vm203, %v170, inf
    %v206 = vsel %vm203, %v175, inf
    %v207 = vsel %vm203, %v180, inf
    %v208 = vsel %vm203, %v185, inf
    %v209 = vmin.f32 %v204, %v208
    %v210 = vsel %vm203, %v190, inf
    %v211 = vmin.f32 %v205, %v210
    %v212 = vsel %vm203, %v195, inf
    %v213 = vmin.f32 %v206, %v212
    %v214 = vsel %vm203, %v200, inf
    %v215 = vmin.f32 %v207, %v214
    %v216 = vmin.f32 %v209, %v211
    %v217 = vmin.f32 %v213, %v215
    %v218 = vmin.f32 %v216, %v217
    %v219 = vrot.slane %v218, 4
    %v220 = vmin.f32 %v218, %v219
    %v221 = vrot.slane %v220, 2
    %v222 = vmin.f32 %v220, %v221
    %v223 = vrot.slane %v222, 1
    %v224 = vmin.f32 %v222, %v223
    %vm225 = vcmp.le.f32.partialorder %v165, %v224
    %vm226 = vcmp.le.f32.partialorder %v170, %v224
    %vm227 = vcmp.le.f32.partialorder %v175, %v224
    %vm228 = vcmp.le.f32.partialorder %v180, %v224
    %vm229 = vcmp.le.f32.partialorder %v185, %v224
    %vm230 = vcmp.le.f32.partialorder %v190, %v224
    %vm231 = vcmp.le.f32.partialorder %v195, %v224
    %vm232 = vcmp.le.f32.partialorder %v200, %v224
    %v233 = vsel %vm225, %v53, 64
    %v234 = vsel %vm226, %v54, 64
    %v235 = vsel %vm227, %v55, 64
    %v236 = vsel %vm228, %v56, 64
    %v237 = vsel %vm229, %v57, 64
    %v238 = vsel %vm230, %v58, 64
    %v239 = vsel %vm231, %v59, 64
    %v240 = vsel %vm232, %v60, 64
    %v241 = vsel %vm203, %v233, 2147483647
    %v242 = vsel %vm203, %v234, 2147483647
    %v243 = vsel %vm203, %v235, 2147483647
    %v244 = vsel %vm203, %v236, 2147483647
    %v245 = vsel %vm203, %v237, 2147483647
    %vm246 = vcmp.lt.s32.totalorder %v241, %v245
    %v247 = vsel %vm246, %v241, %v245
    %v248 = vsel %vm203, %v238, 2147483647
    %vm249 = vcmp.lt.s32.totalorder %v242, %v248
    %v250 = vsel %vm249, %v242, %v248
    %v251 = vsel %vm203, %v239, 2147483647
    %vm252 = vcmp.lt.s32.totalorder %v243, %v251
    %v253 = vsel %vm252, %v243, %v251
    %v254 = vsel %vm203, %v240, 2147483647
    %vm255 = vcmp.lt.s32.totalorder %v244, %v254
    %v256 = vsel %vm255, %v244, %v254
    %vm257 = vcmp.lt.s32.totalorder %v247, %v250
    %v258 = vsel %vm257, %v247, %v250
    %vm259 = vcmp.lt.s32.totalorder %v253, %v256
    %v260 = vsel %vm259, %v253, %v256
    %vm261 = vcmp.lt.s32.totalorder %v258, %v260
    %v262 = vsel %vm261, %v258, %v260
    %v263 = vrot.slane %v262, 4
    %vm264 = vcmp.lt.s32.totalorder %v262, %v263
    %v265 = vsel %vm264, %v262, %v263
    %v266 = vrot.slane %v265, 2
    %vm267 = vcmp.lt.s32.totalorder %v265, %v266
    %v268 = vsel %vm267, %v265, %v266
    %v269 = vrot.slane %v268, 1
    %vm270 = vcmp.lt.s32.totalorder %v268, %v269
    %v271 = vsel %vm270, %v268, %v269
    %vm272 = vcmp.eq.s32.totalorder %v53, %v271
    %vm273 = vcmp.eq.s32.totalorder %v54, %v271
    %vm274 = vcmp.eq.s32.totalorder %v55, %v271
    %vm275 = vcmp.eq.s32.totalorder %v56, %v271
    %vm276 = vcmp.eq.s32.totalorder %v57, %v271
    %vm277 = vcmp.eq.s32.totalorder %v58, %v271
    %vm278 = vcmp.eq.s32.totalorder %v59, %v271
    %vm279 = vcmp.eq.s32.totalorder %v60, %v271
    %v280 = vsel %vm272, 1, 0
    %v281 = vsel %vm273, 1, 0
    %v282 = vsel %vm274, 1, 0
    %v283 = vsel %vm275, 1, 0
    %v284 = vsel %vm276, 1, 0
    %v285 = vsel %vm277, 1, 0
    %v286 = vsel %vm278, 1, 0
    %v287 = vsel %vm279, 1, 0
    %v288 = vcvt.s32.f32 %v280
    %v289 = vcvt.s32.f32 %v281
    %v290 = vcvt.s32.f32 %v282
    %v291 = vcvt.s32.f32 %v283
    %v292 = vcvt.s32.f32 %v284
    %v293 = vcvt.s32.f32 %v285
    %v294 = vcvt.s32.f32 %v286
    %v295 = vcvt.s32.f32 %v287
    %v296 = vld [vmem:[%s2] sm:$0xff]
    %v297 = vld [vmem:[%s2 + $0x8] sm:$0xff]
    %v298 = vld [vmem:[%s2 + $0x10] sm:$0xff]
    %v299 = vld [vmem:[%s2 + $0x18] sm:$0xff]
    %v300 = vld [vmem:[%s2 + $0x20] sm:$0x1]
    %vm301 = vcmask 523264
    %v303 = vsel %vm301, %v296, 0
    %v306 = vsel %vm301, %v297, 0
    %v309 = vsel %vm301, %v298, 0
    %v312 = vsel %vm301, %v299, 0
    %v315 = vsel %vm301, %v300, 0
    %317 = vmatprep.subr.mxu0 0.0
    %318 = vmatpush1.msra.mxu0 %v288
    %319 = vmatprep.subr.mxu0 0.0
    %320 = vmatpush1.msra.mxu0 %v289
    %321 = vmatprep.subr.mxu0 0.0
    %322 = vmatpush1.msra.mxu0 %v290
    %323 = vmatprep.subr.mxu0 0.0
    %324 = vmatpush1.msra.mxu0 %v291
    %325 = vmatprep.subr.mxu0 0.0
    %326 = vmatpush1.msra.mxu0 %v292
    %327 = vmatprep.subr.mxu0 0.0
    %328 = vmatpush1.msra.mxu0 %v293
    %329 = vmatprep.subr.mxu0 0.0
    %330 = vmatpush1.msra.mxu0 %v294
    %331 = vmatprep.subr.mxu0 0.0
    %332 = vmatpush1.msra.mxu0 %v295
    %333 = vmatprep.subr.mxu0 0.0
    %334 = vmatpush1.msra.mxu0 0.0
    %335 = vmatprep.subr.mxu0 0.0
    %336 = vmatpush1.msra.mxu0 0.0
    %337 = vmatprep.subr.mxu0 0.0
    %338 = vmatpush1.msra.mxu0 0.0
    %339 = vmatprep.subr.mxu0 0.0
    %340 = vmatpush1.msra.mxu0 0.0
    %341 = vmatprep.subr.mxu0 0.0
    %342 = vmatpush1.msra.mxu0 0.0
    %343 = vmatprep.subr.mxu0 0.0
    %344 = vmatpush1.msra.mxu0 0.0
    %345 = vmatprep.subr.mxu0 0.0
    %346 = vmatpush1.msra.mxu0 0.0
    %347 = vmatprep.subr.mxu0 0.0
    %348 = vmatpush1.msra.mxu0 0.0
    %349 = vmatprep.subr.mxu0 0.0
    %350 = vmatpush1.msra.mxu0 0.0
    %351 = vmatprep.subr.mxu0 0.0
    %352 = vmatpush1.msra.mxu0 0.0
    %353 = vmatprep.subr.mxu0 0.0
    %354 = vmatpush1.msra.mxu0 0.0
    %355 = vmatprep.subr.mxu0 0.0
    %356 = vmatpush1.msra.mxu0 0.0
    %357 = vmatprep.subr.mxu0 0.0
    %358 = vmatpush1.msra.mxu0 0.0
    %359 = vmatprep.subr.mxu0 0.0
    %360 = vmatpush1.msra.mxu0 0.0
    %361 = vmatprep.subr.mxu0 0.0
    %362 = vmatpush1.msra.mxu0 0.0
    %363 = vmatprep.subr.mxu0 0.0
    %364 = vmatpush1.msra.mxu0 0.0
    %365 = vmatprep.subr.mxu0 0.0
    %366 = vmatpush1.msra.mxu0 0.0
    %367 = vmatprep.subr.mxu0 0.0
    %368 = vmatpush1.msra.mxu0 0.0
    %369 = vmatprep.subr.mxu0 0.0
    %370 = vmatpush1.msra.mxu0 0.0
    %371 = vmatprep.subr.mxu0 0.0
    %372 = vmatpush1.msra.mxu0 0.0
    %373 = vmatprep.subr.mxu0 0.0
    %374 = vmatpush1.msra.mxu0 0.0
    %375 = vmatprep.subr.mxu0 0.0
    %376 = vmatpush1.msra.mxu0 0.0
    %377 = vmatprep.subr.mxu0 0.0
    %378 = vmatpush1.msra.mxu0 0.0
    %379 = vmatprep.subr.mxu0 0.0
    %380 = vmatpush1.msra.mxu0 0.0
    %381 = vmatprep.mubr.f32.mxu0 0.0
    %382 = vmatmul.mubr.f32.gmra.mrb[0].mxu0 %v303
    %v383 = vpop.f32.mrb[0].mxu0
    %v384 = vadd.f32 0.0, %v383
    %v385 = vpop.f32.mrb[0].mxu0
    %386 = vmatprep.mubr.f32.mxu0 0.0
    %387 = vmatmul.mubr.f32.gmra.mrb[0].mxu0 %v306
    %v388 = vpop.f32.mrb[0].mxu0
    %v389 = vadd.f32 0.0, %v388
    %v390 = vpop.f32.mrb[0].mxu0
    %391 = vmatprep.mubr.f32.mxu0 0.0
    %392 = vmatmul.mubr.f32.gmra.mrb[0].mxu0 %v309
    %v393 = vpop.f32.mrb[0].mxu0
    %v394 = vadd.f32 0.0, %v393
    %v395 = vpop.f32.mrb[0].mxu0
    %396 = vmatprep.mubr.f32.mxu0 0.0
    %397 = vmatmul.mubr.f32.gmra.mrb[0].mxu0 %v312
    %v398 = vpop.f32.mrb[0].mxu0
    %v399 = vadd.f32 0.0, %v398
    %v400 = vpop.f32.mrb[0].mxu0
    %401 = vmatprep.mubr.f32.mxu0 0.0
    %402 = vmatmul.mubr.f32.gmra.mrb[0].mxu0 %v315
    %v403 = vpop.f32.mrb[0].mxu0
    %v404 = vadd.f32 0.0, %v403
    %v405 = vpop.f32.mrb[0].mxu0
    %406 = vdwg.mxu0
    %v407 = vsub.f32 %v36, %v384
    %v408 = vsub.f32 %v37, %v389
    %v409 = vsub.f32 %v38, %v394
    %v410 = vsub.f32 %v39, %v399
    %v411 = vsub.f32 1.0, %v404
    %v412 = vmul.f32 %v407, %v407
    %v413 = vmul.f32 %v408, %v408
    %v414 = vmul.f32 %v409, %v409
    %v415 = vmul.f32 %v410, %v410
    %v416 = vsel %vm203, %v412, 0.0
    %v417 = vsel %vm203, %v413, 0.0
    %v418 = vadd.f32 %v416, %v417
    %v419 = vsel %vm203, %v414, 0.0
    %v420 = vadd.f32 %v418, %v419
    %v421 = vsel %vm203, %v415, 0.0
    %v422 = vadd.f32 %v420, %v421
    %v423 = vrot.slane %v422, 4
    %v424 = vadd.f32 %v422, %v423
    %v425 = vrot.slane %v424, 2
    %v426 = vadd.f32 %v424, %v425
    %v427 = vrot.slane %v426, 1
    %v428 = vadd.f32 %v426, %v427
    %v429 = vadd.f32 %v428, 0.0
    %s430 = scalar_lea.vmem %s1, 64
    %v431 = vld [vmem:[%s430] sm:$0xff]
    %v432 = vld [vmem:[%s430 + $0x8] sm:$0xff]
    %v433 = vld [vmem:[%s430 + $0x10] sm:$0xff]
    %v434 = vld [vmem:[%s430 + $0x18] sm:$0xff]
    %v435 = vld [vmem:[%s430 + $0x20] sm:$0xff]
    %v436 = vld [vmem:[%s430 + $0x28] sm:$0xff]
    %v437 = vld [vmem:[%s430 + $0x30] sm:$0xff]
    %v438 = vld [vmem:[%s430 + $0x38] sm:$0xff]
    %v440 = vsel %vm69, %v431, 0
    %v443 = vsel %vm69, %v432, 0
    %v446 = vsel %vm69, %v433, 0
    %v449 = vsel %vm69, %v434, 0
    %v452 = vsel %vm69, %v435, 0
    %v455 = vsel %vm69, %v436, 0
    %v458 = vsel %vm69, %v437, 0
    %v461 = vsel %vm69, %v438, 0
    %v464 = vsel %vm94, %v411, 0
    %466 = vmatprep.subr.mxu0 0.0
    %467 = vmatpush1.msra.mxu0 %v407
    %468 = vmatprep.subr.mxu0 0.0
    %469 = vmatpush1.msra.mxu0 %v408
    %470 = vmatprep.subr.mxu0 0.0
    %471 = vmatpush1.msra.mxu0 %v409
    %472 = vmatprep.subr.mxu0 0.0
    %473 = vmatpush1.msra.mxu0 %v410
    %474 = vmatprep.subr.mxu0 0.0
    %475 = vmatpush1.msra.mxu0 %v464
    %476 = vmatprep.subr.mxu0 0.0
    %477 = vmatpush1.msra.mxu0 0.0
    %478 = vmatprep.subr.mxu0 0.0
    %479 = vmatpush1.msra.mxu0 0.0
    %480 = vmatprep.subr.mxu0 0.0
    %481 = vmatpush1.msra.mxu0 0.0
    %482 = vmatprep.subr.mxu0 0.0
    %483 = vmatpush1.msra.mxu0 0.0
    %484 = vmatprep.subr.mxu0 0.0
    %485 = vmatpush1.msra.mxu0 0.0
    %486 = vmatprep.subr.mxu0 0.0
    %487 = vmatpush1.msra.mxu0 0.0
    %488 = vmatprep.subr.mxu0 0.0
    %489 = vmatpush1.msra.mxu0 0.0
    %490 = vmatprep.subr.mxu0 0.0
    %491 = vmatpush1.msra.mxu0 0.0
    %492 = vmatprep.subr.mxu0 0.0
    %493 = vmatpush1.msra.mxu0 0.0
    %494 = vmatprep.subr.mxu0 0.0
    %495 = vmatpush1.msra.mxu0 0.0
    %496 = vmatprep.subr.mxu0 0.0
    %497 = vmatpush1.msra.mxu0 0.0
    %498 = vmatprep.subr.mxu0 0.0
    %499 = vmatpush1.msra.mxu0 0.0
    %500 = vmatprep.subr.mxu0 0.0
    %501 = vmatpush1.msra.mxu0 0.0
    %502 = vmatprep.subr.mxu0 0.0
    %503 = vmatpush1.msra.mxu0 0.0
    %504 = vmatprep.subr.mxu0 0.0
    %505 = vmatpush1.msra.mxu0 0.0
    %506 = vmatprep.subr.mxu0 0.0
    %507 = vmatpush1.msra.mxu0 0.0
    %508 = vmatprep.subr.mxu0 0.0
    %509 = vmatpush1.msra.mxu0 0.0
    %510 = vmatprep.subr.mxu0 0.0
    %511 = vmatpush1.msra.mxu0 0.0
    %512 = vmatprep.subr.mxu0 0.0
    %513 = vmatpush1.msra.mxu0 0.0
    %514 = vmatprep.subr.mxu0 0.0
    %515 = vmatpush1.msra.mxu0 0.0
    %516 = vmatprep.subr.mxu0 0.0
    %517 = vmatpush1.msra.mxu0 0.0
    %518 = vmatprep.subr.mxu0 0.0
    %519 = vmatpush1.msra.mxu0 0.0
    %520 = vmatprep.subr.mxu0 0.0
    %521 = vmatpush1.msra.mxu0 0.0
    %522 = vmatprep.subr.mxu0 0.0
    %523 = vmatpush1.msra.mxu0 0.0
    %524 = vmatprep.subr.mxu0 0.0
    %525 = vmatpush1.msra.mxu0 0.0
    %526 = vmatprep.subr.mxu0 0.0
    %527 = vmatpush1.msra.mxu0 0.0
    %528 = vmatprep.subr.mxu0 0.0
    %529 = vmatpush1.msra.mxu0 0.0
    %530 = vmatprep.mubr.f32.mxu0 0.0
    %531 = vmatmul.mubr.f32.gmra.mrb[0].mxu0 %v440
    %v532 = vpop.f32.mrb[0].mxu0
    %v533 = vadd.f32 0.0, %v532
    %v534 = vpop.f32.mrb[0].mxu0
    %535 = vmatprep.mubr.f32.mxu0 0.0
    %536 = vmatmul.mubr.f32.gmra.mrb[0].mxu0 %v443
    %v537 = vpop.f32.mrb[0].mxu0
    %v538 = vadd.f32 0.0, %v537
    %v539 = vpop.f32.mrb[0].mxu0
    %540 = vmatprep.mubr.f32.mxu0 0.0
    %541 = vmatmul.mubr.f32.gmra.mrb[0].mxu0 %v446
    %v542 = vpop.f32.mrb[0].mxu0
    %v543 = vadd.f32 0.0, %v542
    %v544 = vpop.f32.mrb[0].mxu0
    %545 = vmatprep.mubr.f32.mxu0 0.0
    %546 = vmatmul.mubr.f32.gmra.mrb[0].mxu0 %v449
    %v547 = vpop.f32.mrb[0].mxu0
    %v548 = vadd.f32 0.0, %v547
    %v549 = vpop.f32.mrb[0].mxu0
    %550 = vmatprep.mubr.f32.mxu0 0.0
    %551 = vmatmul.mubr.f32.gmra.mrb[0].mxu0 %v452
    %v552 = vpop.f32.mrb[0].mxu0
    %v553 = vadd.f32 0.0, %v552
    %v554 = vpop.f32.mrb[0].mxu0
    %555 = vmatprep.mubr.f32.mxu0 0.0
    %556 = vmatmul.mubr.f32.gmra.mrb[0].mxu0 %v455
    %v557 = vpop.f32.mrb[0].mxu0
    %v558 = vadd.f32 0.0, %v557
    %v559 = vpop.f32.mrb[0].mxu0
    %560 = vmatprep.mubr.f32.mxu0 0.0
    %561 = vmatmul.mubr.f32.gmra.mrb[0].mxu0 %v458
    %v562 = vpop.f32.mrb[0].mxu0
    %v563 = vadd.f32 0.0, %v562
    %v564 = vpop.f32.mrb[0].mxu0
    %565 = vmatprep.mubr.f32.mxu0 0.0
    %566 = vmatmul.mubr.f32.gmra.mrb[0].mxu0 %v461
    %v567 = vpop.f32.mrb[0].mxu0
    %v568 = vadd.f32 0.0, %v567
    %v569 = vpop.f32.mrb[0].mxu0
    %570 = vdwg.mxu0
    %v571 = vsel %vm203, %v533, inf
    %v572 = vsel %vm203, %v538, inf
    %v573 = vsel %vm203, %v543, inf
    %v574 = vsel %vm203, %v548, inf
    %v575 = vsel %vm203, %v553, inf
    %v576 = vmin.f32 %v571, %v575
    %v577 = vsel %vm203, %v558, inf
    %v578 = vmin.f32 %v572, %v577
    %v579 = vsel %vm203, %v563, inf
    %v580 = vmin.f32 %v573, %v579
    %v581 = vsel %vm203, %v568, inf
    %v582 = vmin.f32 %v574, %v581
    %v583 = vmin.f32 %v576, %v578
    %v584 = vmin.f32 %v580, %v582
    %v585 = vmin.f32 %v583, %v584
    %v586 = vrot.slane %v585, 4
    %v587 = vmin.f32 %v585, %v586
    %v588 = vrot.slane %v587, 2
    %v589 = vmin.f32 %v587, %v588
    %v590 = vrot.slane %v589, 1
    %v591 = vmin.f32 %v589, %v590
    %vm592 = vcmp.le.f32.partialorder %v533, %v591
    %vm593 = vcmp.le.f32.partialorder %v538, %v591
    %vm594 = vcmp.le.f32.partialorder %v543, %v591
    %vm595 = vcmp.le.f32.partialorder %v548, %v591
    %vm596 = vcmp.le.f32.partialorder %v553, %v591
    %vm597 = vcmp.le.f32.partialorder %v558, %v591
    %vm598 = vcmp.le.f32.partialorder %v563, %v591
    %vm599 = vcmp.le.f32.partialorder %v568, %v591
    %v600 = vsel %vm592, %v53, 64
    %v601 = vsel %vm593, %v54, 64
    %v602 = vsel %vm594, %v55, 64
    %v603 = vsel %vm595, %v56, 64
    %v604 = vsel %vm596, %v57, 64
    %v605 = vsel %vm597, %v58, 64
    %v606 = vsel %vm598, %v59, 64
    %v607 = vsel %vm599, %v60, 64
    %v608 = vsel %vm203, %v600, 2147483647
    %v609 = vsel %vm203, %v601, 2147483647
    %v610 = vsel %vm203, %v602, 2147483647
    %v611 = vsel %vm203, %v603, 2147483647
    %v612 = vsel %vm203, %v604, 2147483647
    %vm613 = vcmp.lt.s32.totalorder %v608, %v612
    %v614 = vsel %vm613, %v608, %v612
    %v615 = vsel %vm203, %v605, 2147483647
    %vm616 = vcmp.lt.s32.totalorder %v609, %v615
    %v617 = vsel %vm616, %v609, %v615
    %v618 = vsel %vm203, %v606, 2147483647
    %vm619 = vcmp.lt.s32.totalorder %v610, %v618
    %v620 = vsel %vm619, %v610, %v618
    %v621 = vsel %vm203, %v607, 2147483647
    %vm622 = vcmp.lt.s32.totalorder %v611, %v621
    %v623 = vsel %vm622, %v611, %v621
    %vm624 = vcmp.lt.s32.totalorder %v614, %v617
    %v625 = vsel %vm624, %v614, %v617
    %vm626 = vcmp.lt.s32.totalorder %v620, %v623
    %v627 = vsel %vm626, %v620, %v623
    %vm628 = vcmp.lt.s32.totalorder %v625, %v627
    %v629 = vsel %vm628, %v625, %v627
    %v630 = vrot.slane %v629, 4
    %vm631 = vcmp.lt.s32.totalorder %v629, %v630
    %v632 = vsel %vm631, %v629, %v630
    %v633 = vrot.slane %v632, 2
    %vm634 = vcmp.lt.s32.totalorder %v632, %v633
    %v635 = vsel %vm634, %v632, %v633
    %v636 = vrot.slane %v635, 1
    %vm637 = vcmp.lt.s32.totalorder %v635, %v636
    %v638 = vsel %vm637, %v635, %v636
    %vm639 = vcmp.eq.s32.totalorder %v53, %v638
    %vm640 = vcmp.eq.s32.totalorder %v54, %v638
    %vm641 = vcmp.eq.s32.totalorder %v55, %v638
    %vm642 = vcmp.eq.s32.totalorder %v56, %v638
    %vm643 = vcmp.eq.s32.totalorder %v57, %v638
    %vm644 = vcmp.eq.s32.totalorder %v58, %v638
    %vm645 = vcmp.eq.s32.totalorder %v59, %v638
    %vm646 = vcmp.eq.s32.totalorder %v60, %v638
    %v647 = vsel %vm639, 1, 0
    %v648 = vsel %vm640, 1, 0
    %v649 = vsel %vm641, 1, 0
    %v650 = vsel %vm642, 1, 0
    %v651 = vsel %vm643, 1, 0
    %v652 = vsel %vm644, 1, 0
    %v653 = vsel %vm645, 1, 0
    %v654 = vsel %vm646, 1, 0
    %v655 = vcvt.s32.f32 %v647
    %v656 = vcvt.s32.f32 %v648
    %v657 = vcvt.s32.f32 %v649
    %v658 = vcvt.s32.f32 %v650
    %v659 = vcvt.s32.f32 %v651
    %v660 = vcvt.s32.f32 %v652
    %v661 = vcvt.s32.f32 %v653
    %v662 = vcvt.s32.f32 %v654
    %s663 = scalar_lea.vmem %s2, 40
    %v664 = vld [vmem:[%s663] sm:$0xff]
    %v665 = vld [vmem:[%s663 + $0x8] sm:$0xff]
    %v666 = vld [vmem:[%s663 + $0x10] sm:$0xff]
    %v667 = vld [vmem:[%s663 + $0x18] sm:$0xff]
    %v668 = vld [vmem:[%s663 + $0x20] sm:$0x1]
    %v670 = vsel %vm301, %v664, 0
    %v673 = vsel %vm301, %v665, 0
    %v676 = vsel %vm301, %v666, 0
    %v679 = vsel %vm301, %v667, 0
    %v682 = vsel %vm301, %v668, 0
    %684 = vmatprep.subr.mxu0 0.0
    %685 = vmatpush1.msra.mxu0 %v655
    %686 = vmatprep.subr.mxu0 0.0
    %687 = vmatpush1.msra.mxu0 %v656
    %688 = vmatprep.subr.mxu0 0.0
    %689 = vmatpush1.msra.mxu0 %v657
    %690 = vmatprep.subr.mxu0 0.0
    %691 = vmatpush1.msra.mxu0 %v658
    %692 = vmatprep.subr.mxu0 0.0
    %693 = vmatpush1.msra.mxu0 %v659
    %694 = vmatprep.subr.mxu0 0.0
    %695 = vmatpush1.msra.mxu0 %v660
    %696 = vmatprep.subr.mxu0 0.0
    %697 = vmatpush1.msra.mxu0 %v661
    %698 = vmatprep.subr.mxu0 0.0
    %699 = vmatpush1.msra.mxu0 %v662
    %700 = vmatprep.subr.mxu0 0.0
    %701 = vmatpush1.msra.mxu0 0.0
    %702 = vmatprep.subr.mxu0 0.0
    %703 = vmatpush1.msra.mxu0 0.0
    %704 = vmatprep.subr.mxu0 0.0
    %705 = vmatpush1.msra.mxu0 0.0
    %706 = vmatprep.subr.mxu0 0.0
    %707 = vmatpush1.msra.mxu0 0.0
    %708 = vmatprep.subr.mxu0 0.0
    %709 = vmatpush1.msra.mxu0 0.0
    %710 = vmatprep.subr.mxu0 0.0
    %711 = vmatpush1.msra.mxu0 0.0
    %712 = vmatprep.subr.mxu0 0.0
    %713 = vmatpush1.msra.mxu0 0.0
    %714 = vmatprep.subr.mxu0 0.0
    %715 = vmatpush1.msra.mxu0 0.0
    %716 = vmatprep.subr.mxu0 0.0
    %717 = vmatpush1.msra.mxu0 0.0
    %718 = vmatprep.subr.mxu0 0.0
    %719 = vmatpush1.msra.mxu0 0.0
    %720 = vmatprep.subr.mxu0 0.0
    %721 = vmatpush1.msra.mxu0 0.0
    %722 = vmatprep.subr.mxu0 0.0
    %723 = vmatpush1.msra.mxu0 0.0
    %724 = vmatprep.subr.mxu0 0.0
    %725 = vmatpush1.msra.mxu0 0.0
    %726 = vmatprep.subr.mxu0 0.0
    %727 = vmatpush1.msra.mxu0 0.0
    %728 = vmatprep.subr.mxu0 0.0
    %729 = vmatpush1.msra.mxu0 0.0
    %730 = vmatprep.subr.mxu0 0.0
    %731 = vmatpush1.msra.mxu0 0.0
    %732 = vmatprep.subr.mxu0 0.0
    %733 = vmatpush1.msra.mxu0 0.0
    %734 = vmatprep.subr.mxu0 0.0
    %735 = vmatpush1.msra.mxu0 0.0
    %736 = vmatprep.subr.mxu0 0.0
    %737 = vmatpush1.msra.mxu0 0.0
    %738 = vmatprep.subr.mxu0 0.0
    %739 = vmatpush1.msra.mxu0 0.0
    %740 = vmatprep.subr.mxu0 0.0
    %741 = vmatpush1.msra.mxu0 0.0
    %742 = vmatprep.subr.mxu0 0.0
    %743 = vmatpush1.msra.mxu0 0.0
    %744 = vmatprep.subr.mxu0 0.0
    %745 = vmatpush1.msra.mxu0 0.0
    %746 = vmatprep.subr.mxu0 0.0
    %747 = vmatpush1.msra.mxu0 0.0
    %748 = vmatprep.mubr.f32.mxu0 0.0
    %749 = vmatmul.mubr.f32.gmra.mrb[0].mxu0 %v670
    %v750 = vpop.f32.mrb[0].mxu0
    %v751 = vadd.f32 0.0, %v750
    %v752 = vpop.f32.mrb[0].mxu0
    %753 = vmatprep.mubr.f32.mxu0 0.0
    %754 = vmatmul.mubr.f32.gmra.mrb[0].mxu0 %v673
    %v755 = vpop.f32.mrb[0].mxu0
    %v756 = vadd.f32 0.0, %v755
    %v757 = vpop.f32.mrb[0].mxu0
    %758 = vmatprep.mubr.f32.mxu0 0.0
    %759 = vmatmul.mubr.f32.gmra.mrb[0].mxu0 %v676
    %v760 = vpop.f32.mrb[0].mxu0
    %v761 = vadd.f32 0.0, %v760
    %v762 = vpop.f32.mrb[0].mxu0
    %763 = vmatprep.mubr.f32.mxu0 0.0
    %764 = vmatmul.mubr.f32.gmra.mrb[0].mxu0 %v679
    %v765 = vpop.f32.mrb[0].mxu0
    %v766 = vadd.f32 0.0, %v765
    %v767 = vpop.f32.mrb[0].mxu0
    %768 = vmatprep.mubr.f32.mxu0 0.0
    %769 = vmatmul.mubr.f32.gmra.mrb[0].mxu0 %v682
    %v770 = vpop.f32.mrb[0].mxu0
    %v771 = vpop.f32.mrb[0].mxu0
    %772 = vdwg.mxu0
    %v773 = vsub.f32 %v407, %v751
    %v774 = vsub.f32 %v408, %v756
    %v775 = vsub.f32 %v409, %v761
    %v776 = vsub.f32 %v410, %v766
    %v777 = vmul.f32 %v773, %v773
    %v778 = vmul.f32 %v774, %v774
    %v779 = vmul.f32 %v775, %v775
    %v780 = vmul.f32 %v776, %v776
    %v781 = vsel %vm203, %v777, 0.0
    %v782 = vsel %vm203, %v778, 0.0
    %v783 = vadd.f32 %v781, %v782
    %v784 = vsel %vm203, %v779, 0.0
    %v785 = vadd.f32 %v783, %v784
    %v786 = vsel %vm203, %v780, 0.0
    %v787 = vadd.f32 %v785, %v786
    %v788 = vrot.slane %v787, 4
    %v789 = vadd.f32 %v787, %v788
    %v790 = vrot.slane %v789, 2
    %v791 = vadd.f32 %v789, %v790
    %v792 = vrot.slane %v791, 1
    %v793 = vadd.f32 %v791, %v792
    %v794 = vadd.f32 %v429, %v793
    %v795 = vsub.f32 %v36, %v773
    %v796 = vsub.f32 %v37, %v774
    %v797 = vsub.f32 %v38, %v775
    %v798 = vsub.f32 %v39, %v776
    %799 = vxpose.xlu0.b32.start [1/16] %v795, 128
    %800 = vxpose.xlu0.b32.cont [2/16] %v796, 128
    %801 = vxpose.xlu0.b32.cont [3/16] %v797, 128
    %802 = vxpose.xlu0.b32.cont [4/16] %v798, 128
    %803 = vxpose.xlu0.b32.cont [5/16] 0.0, 128
    %804 = vxpose.xlu0.b32.cont [6/16] 0.0, 128
    %805 = vxpose.xlu0.b32.cont [7/16] 0.0, 128
    %806 = vxpose.xlu0.b32.cont [8/16] 0.0, 128
    %807 = vxpose.xlu0.b32.cont [9/16] 0.0, 128
    %808 = vxpose.xlu0.b32.cont [10/16] 0.0, 128
    %809 = vxpose.xlu0.b32.cont [11/16] 0.0, 128
    %810 = vxpose.xlu0.b32.cont [12/16] 0.0, 128
    %811 = vxpose.xlu0.b32.cont [13/16] 0.0, 128
    %812 = vxpose.xlu0.b32.cont [14/16] 0.0, 128
    %813 = vxpose.xlu0.b32.cont [15/16] 0.0, 128
    %814 = vxpose.xlu0.b32.end [16/16] 0.0, 128
    %v815 = vpop.trf.xlu0
    %v816 = vpop.trf.xlu0
    %v817 = vpop.trf.xlu0
    %v818 = vpop.trf.xlu0
    %v819 = vpop.trf.xlu0
    %v820 = vpop.trf.xlu0
    %v821 = vpop.trf.xlu0
    %v822 = vpop.trf.xlu0
    %v823 = vpop.trf.xlu0
    %v824 = vpop.trf.xlu0
    %v825 = vpop.trf.xlu0
    %v826 = vpop.trf.xlu0
    %v827 = vpop.trf.xlu0
    %v828 = vpop.trf.xlu0
    %v829 = vpop.trf.xlu0
    %v830 = vpop.trf.xlu0
    %vm831 = vcmask 261120
    %832 = vst.msk [vmem:[#allocation2] sm:$0xff] %vm831, %v815
    %833 = vst.msk [vmem:[#allocation2 + $0x8] sm:$0xff] %vm831, %v816
    %vm834 = vcmask 122880
    %v835 = vsel %vm834, %v794, 0.0
    %836 = vadd.xlane.f32.xlu0 %v835
    %v837 = vpop.xlane.xlu0 %836
    %v838 = vrot.slane %v837, 4
    %v839 = vadd.f32 %v837, %v838
    %v840 = vrot.slane %v839, 2
    %v841 = vadd.f32 %v839, %v840
    %v842 = vrot.slane %v841, 1
    %v843 = vadd.f32 %v841, %v842
    %s844 = vtos %v843
    %v845 = vstv %s844
    %vm846 = vcmask 0
    %847 = vst.msk [vmem:[#allocation4] sm:$0x1] %vm846, %v845
    // Predicated region
    $region14: #{tpu_custom_call.1} parent=1 // pred_check
      _
    $region15: #{tpu_custom_call.1} parent=1 // pred_check_branch
      %849 = sbr.rel (0) target = $region17
    $region16: #{tpu_custom_call.1} parent=1 // pred_region
      %s851 = ssub.s32 256, 256
      %852 = vsyncadd [#allocation3], %s851
      %s853 = sshll.u32 [#allocation2], 4
      %s854 = int_to_ptr.vmem [resolvable:$true] %s853
      %859 = dma.vmem_to_hbm [thread:$0]  %s854, 256, %s3, [#allocation3], 128, 128, 8
    $region17: #{tpu_custom_call.1} parent=1 // pred_fallthru
      _
    // Predicated region
    $region18: #{tpu_custom_call.1} parent=1 // pred_check
      _
    $region19: #{tpu_custom_call.1} parent=1 // pred_check_branch
      %861 = sbr.rel (0) target = $region21
    $region20: #{tpu_custom_call.1} parent=1 // pred_region
      %s863 = ssub.s32 16, 16
      %864 = vsyncadd [#allocation5], %s863
      %s866 = sshll.u32 [#allocation4], 4
      %s867 = int_to_ptr.vmem [resolvable:$true] %s866
      %869 = dma.vmem_to_hbm [thread:$0]  %s867, 16, %s4, [#allocation5]
    $region21: #{tpu_custom_call.1} parent=1 // pred_fallthru
      _
    // Predicated region
    $region22: #{tpu_custom_call.1} parent=1 // pred_check
      _
    $region23: #{tpu_custom_call.1} parent=1 // pred_check_branch
      %871 = sbr.rel (0) target = $region25
    $region24: #{tpu_custom_call.1} parent=1 // pred_region
      %872 = dma.done [#allocation3], 256
    $region25: #{tpu_custom_call.1} parent=1 // pred_fallthru
      _
    // Predicated region
    $region26: #{tpu_custom_call.1} parent=1 // pred_check
      _
    $region27: #{tpu_custom_call.1} parent=1 // pred_check_branch
      %874 = sbr.rel (0) target = $region29
    $region28: #{tpu_custom_call.1} parent=1 // pred_region
      %875 = dma.done [#allocation5], 16
    $region29: #{tpu_custom_call.1} parent=1 // pred_fallthru
      _
    %876 = vsyncpa [#allocation3], 1
    %877 = vsyncpa [#allocation5], 1

</llo_original>
